<compile_context>
chip_gen: v7x
topology: tpu7x:2x2x1
jax: 0.10.0
libtpu: 0.0.40
codegen_flags: <defaults>
</compile_context>

<pallas_src>
import jax
import jax.numpy as jnp
from jax import lax
from jax.experimental import pallas as pl
from jax.experimental.pallas import tpu as pltpu


def _round_up(v, m):
    return (v + m - 1) // m * m


def _gamma_via_onehot(y_ref, embed_ref):
    # gamma[i, :] = embed[y[i], :] via a one-hot matmul on the MXU.
    # one_hot values are exactly 0/1, so this is a lossless gather.
    tm = y_ref.shape[0]
    n_steps = embed_ref.shape[0]
    steps = lax.broadcasted_iota(jnp.int32, (tm, n_steps), 1)
    one_hot = (y_ref[...] == steps).astype(jnp.float32)
    return jnp.dot(one_hot, embed_ref[...], preferred_element_type=jnp.float32)


def _make_kernel(single_k_step, gather_in_kernel):
    """Build the kernel body for the chosen specialization."""
    if single_k_step and gather_in_kernel:
        def kernel(x_ref, w_ref, b_ref, embed_ref, y_ref, o_ref):
            acc = jnp.dot(x_ref[...], w_ref[...],
                          preferred_element_type=jnp.float32) + b_ref[...]
            o_ref[...] = (_gamma_via_onehot(y_ref, embed_ref)
                          * acc).astype(o_ref.dtype)
        return kernel

    if single_k_step:
        def kernel(x_ref, w_ref, b_ref, gamma_ref, o_ref):
            acc = jnp.dot(x_ref[...], w_ref[...],
                          preferred_element_type=jnp.float32) + b_ref[...]
            o_ref[...] = (gamma_ref[...] * acc).astype(o_ref.dtype)
        return kernel

    if gather_in_kernel:
        def kernel(x_ref, w_ref, b_ref, embed_ref, y_ref, o_ref, acc_ref):
            k = pl.program_id(2)

            @pl.when(k == 0)
            def _():  # fold bias into the accumulator init
                acc_ref[...] = jnp.broadcast_to(b_ref[...], acc_ref.shape)

            acc_ref[...] += jnp.dot(x_ref[...], w_ref[...],
                                    preferred_element_type=jnp.float32)

            @pl.when(k == pl.num_programs(2) - 1)
            def _():
                o_ref[...] = (_gamma_via_onehot(y_ref, embed_ref)
                              * acc_ref[...]).astype(o_ref.dtype)
        return kernel

    def kernel(x_ref, w_ref, b_ref, gamma_ref, o_ref, acc_ref):
        k = pl.program_id(2)

        @pl.when(k == 0)
        def _():
            acc_ref[...] = jnp.broadcast_to(b_ref[...], acc_ref.shape)

        acc_ref[...] += jnp.dot(x_ref[...], w_ref[...],
                                preferred_element_type=jnp.float32)

        @pl.when(k == pl.num_programs(2) - 1)
        def _():
            o_ref[...] = (gamma_ref[...] * acc_ref[...]).astype(o_ref.dtype)
    return kernel


def prepare_params(w, b, embed_table, *, tn=512, tk=2048,
                   matmul_dtype=jnp.bfloat16):
    """One-time (init-time) padding / transpose / cast of layer parameters."""
    num_out, num_in = w.shape
    n_steps = embed_table.shape[0]

    tn = min(tn, _round_up(num_out, 128))   # lane axis tile
    tk = min(tk, _round_up(num_in, 128))    # contraction tile (K collapses if num_in <= tk)
    nout_pad = _round_up(num_out, tn)
    nin_pad = _round_up(num_in, tk)

    w_t = jnp.pad(w.T, ((0, nin_pad - num_in),
                        (0, nout_pad - num_out))).astype(matmul_dtype)   # [K, N]
    b_p = jnp.pad(b, (0, nout_pad - num_out)).reshape(1, nout_pad).astype(jnp.float32)
    e_p = jnp.pad(embed_table, ((0, 0), (0, nout_pad - num_out))).astype(jnp.float32)

    return dict(w_t=w_t, b=b_p, embed=e_p,
                num_in=num_in, num_out=num_out, n_steps=n_steps,
                nin_pad=nin_pad, nout_pad=nout_pad, tn=tn, tk=tk,
                matmul_dtype=matmul_dtype)


def conditional_linear(x, y, params, *, tm=512,
                       vmem_limit_bytes=48 * 1024 * 1024):
    """(x @ w.T + b) * embed[y]  ->  [B, num_out] f32."""
    B, num_in = x.shape
    num_out = params["num_out"]
    n_steps = params["n_steps"]
    nin_pad, nout_pad = params["nin_pad"], params["nout_pad"]
    tn, tk = params["tn"], params["tk"]
    dtype = params["matmul_dtype"]

    # Sublane (batch) padding rounded to the dtype packing: bf16 packs 16 rows.
    itemsize = jnp.dtype(dtype).itemsize
    pack = 8 if itemsize == 4 else (16 if itemsize == 2 else 32)
    tm = min(tm, _round_up(B, pack))
    B_pad = _round_up(B, tm)

    # v7x megacore: expose >= 2 parallel (i, j) blocks when the problem allows.
    if (B_pad // tm) * (nout_pad // tn) < 2 and tn % 256 == 0:
        tn //= 2

    k_steps = nin_pad // tk
    single_k = (k_steps == 1)
    # In-kernel one-hot gather only pays off for small embed tables; for large
    # n_steps (DDPM uses 1000) gather gamma once in the wrapper instead.
    gather_in_kernel = (n_steps <= tm)

    x_p = jnp.pad(x, ((0, B_pad - B), (0, nin_pad - num_in))).astype(dtype)

    if gather_in_kernel:
        y_p = jnp.pad(y.astype(jnp.int32), (0, B_pad - B)).reshape(B_pad, 1)
        extra_inputs = (params["embed"], y_p)
    else:
        gamma = jnp.take(params["embed"], y.astype(jnp.int32), axis=0)  # [B, nout_pad] f32
        gamma = jnp.pad(gamma, ((0, B_pad - B), (0, 0)))
        extra_inputs = (gamma,)

    if single_k:
        grid = (B_pad // tm, nout_pad // tn)
        x_spec = pl.BlockSpec((tm, tk), lambda i, j: (i, 0))
        w_spec = pl.BlockSpec((tk, tn), lambda i, j: (0, j))
        b_spec = pl.BlockSpec((1, tn), lambda i, j: (0, j))
        out_spec = pl.BlockSpec((tm, tn), lambda i, j: (i, j))
        if gather_in_kernel:
            extra_specs = [pl.BlockSpec((n_steps, tn), lambda i, j: (0, j)),
                           pl.BlockSpec((tm, 1), lambda i, j: (i, 0))]
        else:
            extra_specs = [pl.BlockSpec((tm, tn), lambda i, j: (i, j))]
        scratch_shapes = []
        dim_sem = ("parallel", "parallel")
    else:
        grid = (B_pad // tm, nout_pad // tn, k_steps)
        x_spec = pl.BlockSpec((tm, tk), lambda i, j, k: (i, k))
        w_spec = pl.BlockSpec((tk, tn), lambda i, j, k: (k, j))
        b_spec = pl.BlockSpec((1, tn), lambda i, j, k: (0, j))
        out_spec = pl.BlockSpec((tm, tn), lambda i, j, k: (i, j))
        if gather_in_kernel:
            extra_specs = [pl.BlockSpec((n_steps, tn), lambda i, j, k: (0, j)),
                           pl.BlockSpec((tm, 1), lambda i, j, k: (i, 0))]
        else:
            extra_specs = [pl.BlockSpec((tm, tn), lambda i, j, k: (i, j))]
        scratch_shapes = [pltpu.VMEM((tm, tn), jnp.float32)]
        dim_sem = ("parallel", "parallel", "arbitrary")

    # Cost estimate including re-streaming factors (W per i-block, x per j-block).
    n_i, n_j = B_pad // tm, nout_pad // tn
    gamma_flops = 2 * B_pad * n_steps * nout_pad if gather_in_kernel else 0
    bytes_accessed = (B_pad * nin_pad * itemsize * n_j          # x, re-streamed per j
                      + nin_pad * nout_pad * itemsize * n_i     # W^T, re-streamed per i
                      + nout_pad * 4 * n_i                      # bias
                      + B_pad * nout_pad * 4)                   # output
    if gather_in_kernel:
        bytes_accessed += n_steps * nout_pad * 4 * n_i + B_pad * 4 * n_j
    else:
        bytes_accessed += B_pad * nout_pad * 4                  # gamma stream
    cost = pl.CostEstimate(flops=2 * B_pad * nin_pad * nout_pad + gamma_flops,
                           transcendentals=0, bytes_accessed=bytes_accessed)

    out = pl.pallas_call(
        _make_kernel(single_k, gather_in_kernel),
        out_shape=jax.ShapeDtypeStruct((B_pad, nout_pad), jnp.float32),
        grid_spec=pltpu.PrefetchScalarGridSpec(
            num_scalar_prefetch=0,
            grid=grid,
            in_specs=[x_spec, w_spec, b_spec] + extra_specs,
            out_specs=out_spec,
            scratch_shapes=scratch_shapes,
        ),
        compiler_params=pltpu.CompilerParams(
            dimension_semantics=dim_sem,
            vmem_limit_bytes=vmem_limit_bytes),
        cost_estimate=cost,
    )(x_p, params["w_t"], params["b"], *extra_inputs)

    # Padded batch rows of y select embed[0]; safe because we slice back to B here.
    return out[:B, :num_out]


if __name__ == "__main__":
    # Small shapes consistent with the module's forward.
    B, num_in, num_out, n_steps = 8, 32, 32, 8

    key = jax.random.PRNGKey(0)
    k_params, k_x, k_y = jax.random.split(key, 3)
    kw, kb, ke = jax.random.split(k_params, 3)

    # nn.Linear init: U(-1/sqrt(num_in), 1/sqrt(num_in)); embed.uniform_(): U(0,1).
    bound = 1.0 / jnp.sqrt(jnp.float32(num_in))
    w = jax.random.uniform(kw, (num_out, num_in), jnp.float32, -bound, bound)
    b = jax.random.uniform(kb, (num_out,), jnp.float32, -bound, bound)
    embed = jax.random.uniform(ke, (n_steps, num_out), jnp.float32, 0.0, 1.0)
    x = jax.random.normal(k_x, (B, num_in), jnp.float32)
    y = jax.random.randint(k_y, (B,), 0, n_steps, jnp.int32)

    # One-time parameter preparation (padding / transpose / cast at init time).
    params = prepare_params(w, b, embed)

    out = conditional_linear(x, y, params)
    out = jax.block_until_ready(out)

    # Reference with matching matmul precision (bf16 operands, f32 accumulate).
    ref = (jnp.dot(x.astype(jnp.bfloat16), w.T.astype(jnp.bfloat16),
                   preferred_element_type=jnp.float32) + b) * embed[y]
    assert out.shape == (B, num_out)
    assert jnp.allclose(out, ref, atol=1e-4, rtol=1e-4), "mismatch vs reference"

    print("KERNEL_OK")
</pallas_src>

<mosaic_0001>
module attributes {stable_mosaic.version = 11 : i64} {
  func.func @kernel(%arg0: i32, %arg1: i32, %arg2: memref<16x128xbf16, #tpu.memory_space<vmem>>, %arg3: memref<128x128xbf16, #tpu.memory_space<vmem>>, %arg4: memref<1x128xf32, #tpu.memory_space<vmem>>, %arg5: memref<8x128xf32, #tpu.memory_space<vmem>>, %arg6: memref<16x1xi32, #tpu.memory_space<vmem>>, %arg7: memref<16x128xf32, #tpu.memory_space<vmem>>) attributes {dimension_semantics = [#tpu.dimension_semantics<parallel>, #tpu.dimension_semantics<parallel>], iteration_bounds = array<i64: 1, 1>, scalar_prefetch = 0 : i64, scratch_operands = 0 : i64, tpu.core_type = #tpu.core_type<tc>, window_params = [{transform_indices = @transform_0, window_bounds = array<i64: 16, 128>}, {transform_indices = @transform_1, window_bounds = array<i64: 128, 128>}, {transform_indices = @transform_2, window_bounds = array<i64: 1, 128>}, {transform_indices = @transform_3, window_bounds = array<i64: 8, 128>}, {transform_indices = @transform_4, window_bounds = array<i64: 16, 1>}, {transform_indices = @transform_5, window_bounds = array<i64: 16, 128>}]} {
    %c0 = arith.constant 0 : index
    %c0_0 = arith.constant 0 : index
    %0 = vector.load %arg2[%c0, %c0_0] : memref<16x128xbf16, #tpu.memory_space<vmem>>, vector<16x128xbf16>
    %c0_1 = arith.constant 0 : index
    %c0_2 = arith.constant 0 : index
    %1 = vector.load %arg3[%c0_1, %c0_2] : memref<128x128xbf16, #tpu.memory_space<vmem>>, vector<128x128xbf16>
    %cst = arith.constant dense<0.000000e+00> : vector<16x128xf32>
    %2 = tpu.matmul %0, %1, %cst {dimension_numbers = #tpu.dot_dimension_numbers<[1], [0], [0], [1], [0, 0, 1, 1], [], []>} : vector<16x128xbf16>, vector<128x128xbf16>, vector<16x128xf32> -> vector<16x128xf32>
    %c0_3 = arith.constant 0 : index
    %c0_4 = arith.constant 0 : index
    %3 = vector.load %arg4[%c0_3, %c0_4] : memref<1x128xf32, #tpu.memory_space<vmem>>, vector<1x128xf32>
    %4 = vector.broadcast %3 : vector<1x128xf32> to vector<16x128xf32>
    %5 = arith.addf %2, %4 : vector<16x128xf32>
    %6 = tpu.iota {dimensions = array<i32: 1>} : vector<16x8xi32>
    %c0_5 = arith.constant 0 : index
    %c0_6 = arith.constant 0 : index
    %7 = vector.load %arg6[%c0_5, %c0_6] : memref<16x1xi32, #tpu.memory_space<vmem>>, vector<16x1xi32>
    %8 = vector.broadcast %7 : vector<16x1xi32> to vector<16x8xi32>
    %9 = arith.cmpi eq, %8, %6 : vector<16x8xi32>
    %10 = arith.extui %9 : vector<16x8xi1> to vector<16x8xi32>
    %11 = arith.sitofp %10 : vector<16x8xi32> to vector<16x8xf32>
    %c0_7 = arith.constant 0 : index
    %c0_8 = arith.constant 0 : index
    %12 = vector.load %arg5[%c0_7, %c0_8] : memref<8x128xf32, #tpu.memory_space<vmem>>, vector<8x128xf32>
    %cst_9 = arith.constant dense<0.000000e+00> : vector<16x128xf32>
    %13 = tpu.matmul %11, %12, %cst_9 {dimension_numbers = #tpu.dot_dimension_numbers<[1], [0], [0], [1], [0, 0, 1, 1], [], []>} : vector<16x8xf32>, vector<8x128xf32>, vector<16x128xf32> -> vector<16x128xf32>
    %14 = arith.mulf %13, %5 : vector<16x128xf32>
    %c0_10 = arith.constant 0 : index
    %c0_11 = arith.constant 0 : index
    %15 = vector.load %arg7[%c0_10, %c0_11] : memref<16x128xf32, #tpu.memory_space<vmem>>, vector<16x128xf32>
    tpu.vector_store %arg7[%c0_10, %c0_11], %14 {strides = array<i32>} : memref<16x128xf32, #tpu.memory_space<vmem>>, vector<16x128xf32>,
    return
  }
  func.func @transform_0(%arg0: i32, %arg1: i32) -> (i32, i32) {
    %c0_i32 = arith.constant 0 : i32
    %c0_i32_0 = arith.constant 0 : i32
    return %arg0, %c0_i32 : i32, i32
  }
  func.func @transform_1(%arg0: i32, %arg1: i32) -> (i32, i32) {
    %c0_i32 = arith.constant 0 : i32
    %c0_i32_0 = arith.constant 0 : i32
    return %c0_i32, %arg1 : i32, i32
  }
  func.func @transform_2(%arg0: i32, %arg1: i32) -> (i32, i32) {
    %c0_i32 = arith.constant 0 : i32
    %c0_i32_0 = arith.constant 0 : i32
    return %c0_i32, %arg1 : i32, i32
  }
  func.func @transform_3(%arg0: i32, %arg1: i32) -> (i32, i32) {
    %c0_i32 = arith.constant 0 : i32
    %c0_i32_0 = arith.constant 0 : i32
    return %c0_i32, %arg1 : i32, i32
  }
  func.func @transform_4(%arg0: i32, %arg1: i32) -> (i32, i32) {
    %c0_i32 = arith.constant 0 : i32
    %c0_i32_0 = arith.constant 0 : i32
    return %arg0, %c0_i32 : i32, i32
  }
  func.func @transform_5(%arg0: i32, %arg1: i32) -> (i32, i32) {
    %c0_i32 = arith.constant 0 : i32
    return %arg0, %arg1 : i32, i32
  }
}

</mosaic_0001>

<llo_original>
// kernel: tpu_custom_call.1
$region0: #{tpu_custom_call.1}
  #allocation0 [shape = 'u32[]', space=smem, size = 0x4, offset = 0x4, fixed_abs, tag = 'smem constant byte address 0x4 - core index']
  #allocation1 [shape = 'u32[144,128]{1,0:T(1,128)}', space=vmem, size = 0x12000, scoped, tag = 'internal scratch']
  %s0 = inlined_call_operand.vmem [shape: bf16[16,128], index: 0, kind: input, shape index: {}]
  %s1 = inlined_call_operand.hbm [shape: bf16[128,128], index: 1, kind: input, shape index: {}]
  %s2 = inlined_call_operand.vmem [shape: f32[1,128], index: 2, kind: input, shape index: {}]
  %s3 = inlined_call_operand.vmem [shape: f32[8,128], index: 3, kind: input, shape index: {}]
  %s4 = inlined_call_operand.vmem [shape: s32[16,1], index: 4, kind: input, shape index: {}]
  %s5 = inlined_call_operand.hbm [shape: f32[16,128], index: 5, kind: output, shape index: {}]
  %s6 = sld [smem:[#allocation0]]
  $region34: #{tpu_custom_call.1} parent=0
    _
  %s8 = ssub.s32 1, %s6
  %s9 = scalar_select 0, %s8, %s6
  $region1: #{tpu_custom_call.1} parent=0
    #allocation2 [shape = 'u8[32768]{0}', space=vmem, size = 0x8000, scoped, tag = 'input window, operand 1, single buffered']
    #allocation3 [shape = 's32[1]{0}', space=sflag, size = 0x4, scoped, tag = 'scoped memory for tpu_custom_call.1']
    #allocation4 [shape = 's32[1]{0}', space=sflag, size = 0x4, scoped, tag = 'scoped memory for tpu_custom_call.1']
    #allocation5 [shape = 'u8[8192]{0}', space=vmem, size = 0x2000, scoped, tag = 'output window, operand 0, single buffered']
    %10 = vsyncpa [#allocation3], 0
    %11 = vsyncpa [#allocation4], 0
    // Predicated region
    $region2: #{tpu_custom_call.1} parent=1 // pred_check
      _
    $region3: #{tpu_custom_call.1} parent=1 // pred_check_branch
      %13 = sbr.rel (0) target = $region5
    $region4: #{tpu_custom_call.1} parent=1 // pred_region
      _
    $region5: #{tpu_custom_call.1} parent=1 // pred_fallthru
      _
    // Predicated region
    $region6: #{tpu_custom_call.1} parent=1 // pred_check
      _
    $region7: #{tpu_custom_call.1} parent=1 // pred_check_branch
      %15 = sbr.rel (0) target = $region9
    $region8: #{tpu_custom_call.1} parent=1 // pred_region
      %s17 = ssub.s32 1024, 1024
      %18 = vsyncadd [#allocation3], %s17
      %s19 = sshll.u32 [#allocation2], 4
      %s20 = int_to_ptr.vmem [resolvable:$true] %s19
      %25 = dma.hbm_to_vmem [thread:$0]  %s1, 1024, %s20, [#allocation3], 64, 64, 4
    $region9: #{tpu_custom_call.1} parent=1 // pred_fallthru
      _
    // Predicated region
    $region10: #{tpu_custom_call.1} parent=1 // pred_check
      _
    $region11: #{tpu_custom_call.1} parent=1 // pred_check_branch
      %27 = sbr.rel (0) target = $region13
    $region12: #{tpu_custom_call.1} parent=1 // pred_region
      _
    $region13: #{tpu_custom_call.1} parent=1 // pred_fallthru
      _
    // Predicated region
    $region14: #{tpu_custom_call.1} parent=1 // pred_check
      _
    $region15: #{tpu_custom_call.1} parent=1 // pred_check_branch
      %29 = sbr.rel (0) target = $region17
    $region16: #{tpu_custom_call.1} parent=1 // pred_region
      _
    $region17: #{tpu_custom_call.1} parent=1 // pred_fallthru
      _
    // Predicated region
    $region18: #{tpu_custom_call.1} parent=1 // pred_check
      _
    $region19: #{tpu_custom_call.1} parent=1 // pred_check_branch
      %31 = sbr.rel (0) target = $region21
    $region20: #{tpu_custom_call.1} parent=1 // pred_region
      _
    $region21: #{tpu_custom_call.1} parent=1 // pred_fallthru
      _
    // Predicated region
    $region22: #{tpu_custom_call.1} parent=1 // pred_check
      _
    $region23: #{tpu_custom_call.1} parent=1 // pred_check_branch
      %33 = sbr.rel (0) target = $region25
    $region24: #{tpu_custom_call.1} parent=1 // pred_region
      %34 = dma.done [#allocation3], 1024
    $region25: #{tpu_custom_call.1} parent=1 // pred_fallthru
      _
    %v36 = vld [vmem:[%s0] sm:$0xf]
    %v37 = vld [vmem:[%s0 + $0x4] sm:$0xf]
    %v38 = vld [vmem:[#allocation2] sm:$0xf]
    %v39 = vld [vmem:[#allocation2 + $0x4] sm:$0xf]
    %v40 = vld [vmem:[#allocation2 + $0x8] sm:$0xf]
    %v41 = vld [vmem:[#allocation2 + $0xc] sm:$0xf]
    %v42 = vld [vmem:[#allocation2 + $0x10] sm:$0xf]
    %v43 = vld [vmem:[#allocation2 + $0x14] sm:$0xf]
    %v44 = vld [vmem:[#allocation2 + $0x18] sm:$0xf]
    %v45 = vld [vmem:[#allocation2 + $0x1c] sm:$0xf]
    %v46 = vld [vmem:[#allocation2 + $0x20] sm:$0xf]
    %v47 = vld [vmem:[#allocation2 + $0x24] sm:$0xf]
    %v48 = vld [vmem:[#allocation2 + $0x28] sm:$0xf]
    %v49 = vld [vmem:[#allocation2 + $0x2c] sm:$0xf]
    %v50 = vld [vmem:[#allocation2 + $0x30] sm:$0xf]
    %v51 = vld [vmem:[#allocation2 + $0x34] sm:$0xf]
    %v52 = vld [vmem:[#allocation2 + $0x38] sm:$0xf]
    %v53 = vld [vmem:[#allocation2 + $0x3c] sm:$0xf]
    %v54 = vld [vmem:[%s2] sm:$0x1]
    %v56 = vlaneseq
    %v57 = vshrl.u32 %v56, 7
    %v58 = vsub.s32 0, %v57
    %v59 = vrot.slane %v54, %v58
    %v63 = vunpack.c.l.b16 %v36
    %v64 = vunpack.c.l.b16 %v37
    %v65 = vpack.c.b16 %v64, %v63
    %v83 = vunpack.c.l.b16 %v38
    %v84 = vunpack.c.l.b16 %v39
    %v85 = vunpack.c.l.b16 %v40
    %v86 = vunpack.c.l.b16 %v41
    %v87 = vunpack.c.l.b16 %v42
    %v88 = vunpack.c.l.b16 %v43
    %v89 = vunpack.c.l.b16 %v44
    %v90 = vunpack.c.l.b16 %v45
    %v91 = vunpack.c.l.b16 %v46
    %v92 = vunpack.c.l.b16 %v47
    %v93 = vunpack.c.l.b16 %v48
    %v94 = vunpack.c.l.b16 %v49
    %v95 = vunpack.c.l.b16 %v50
    %v96 = vunpack.c.l.b16 %v51
    %v97 = vunpack.c.l.b16 %v52
    %v98 = vunpack.c.l.b16 %v53
    %v99 = vpack.c.b16 %v84, %v83
    %v100 = vpack.c.b16 %v86, %v85
    %v101 = vpack.c.b16 %v88, %v87
    %v102 = vpack.c.b16 %v90, %v89
    %v103 = vpack.c.b16 %v92, %v91
    %v104 = vpack.c.b16 %v94, %v93
    %v105 = vpack.c.b16 %v96, %v95
    %v106 = vpack.c.b16 %v98, %v97
    %115 = vmatprep.subr.bf16.mxu0 0
    %116 = vmatpush1.bf16.msra.mxu0 %v99
    %117 = vmatprep.subr.bf16.mxu0 0
    %118 = vmatpush1.bf16.msra.mxu0 %v100
    %119 = vmatprep.subr.bf16.mxu0 0
    %120 = vmatpush1.bf16.msra.mxu0 %v101
    %121 = vmatprep.subr.bf16.mxu0 0
    %122 = vmatpush1.bf16.msra.mxu0 %v102
    %123 = vmatprep.subr.bf16.mxu0 0
    %124 = vmatpush1.bf16.msra.mxu0 %v103
    %125 = vmatprep.subr.bf16.mxu0 0
    %126 = vmatpush1.bf16.msra.mxu0 %v104
    %127 = vmatprep.subr.bf16.mxu0 0
    %128 = vmatpush1.bf16.msra.mxu0 %v105
    %129 = vmatprep.subr.bf16.mxu0 0
    %130 = vmatpush1.bf16.msra.mxu0 %v106
    %131 = vmatprep.subr.bf16.mxu0 0
    %132 = vmatpush1.bf16.msra.mxu0 0
    %133 = vmatprep.subr.bf16.mxu0 0
    %134 = vmatpush1.bf16.msra.mxu0 0
    %135 = vmatprep.subr.bf16.mxu0 0
    %136 = vmatpush1.bf16.msra.mxu0 0
    %137 = vmatprep.subr.bf16.mxu0 0
    %138 = vmatpush1.bf16.msra.mxu0 0
    %139 = vmatprep.subr.bf16.mxu0 0
    %140 = vmatpush1.bf16.msra.mxu0 0
    %141 = vmatprep.subr.bf16.mxu0 0
    %142 = vmatpush1.bf16.msra.mxu0 0
    %143 = vmatprep.subr.bf16.mxu0 0
    %144 = vmatpush1.bf16.msra.mxu0 0
    %145 = vmatprep.subr.bf16.mxu0 0
    %146 = vmatpush1.bf16.msra.mxu0 0
    %147 = vmatprep.mubr.bf16.mxu0 0
    %148 = vmatmul.mubr.bf16.gmra.mrb[0].mxu0 %v65
    %v149 = vpop.f32.mrb[0].mxu0
    %v150 = vadd.f32 %v59, %v149
    %v151 = vpop.f32.mrb[0].mxu0
    %v152 = vpop.f32.mrb[0].mxu0
    %v153 = vadd.f32 %v59, %v152
    %v154 = vpop.f32.mrb[0].mxu0
    %155 = vdwg.mxu0
    %v156 = vlaneseq
    %v157 = vand.u32 %v156, 127
    %v158 = vld [vmem:[%s4] sm:$0xff]
    %v159 = vld [vmem:[%s4 + $0x8] sm:$0xff]
    %160 = vset.pattern.permute.xlu0 0
    %161 = vperm.xlu0 %160, %v158
    %v162 = vpop.permute.xlu0 %161
    %163 = vset.pattern.permute.xlu0 0
    %164 = vperm.xlu0 %163, %v159
    %v165 = vpop.permute.xlu0 %164
    %vm166 = vcmp.eq.s32.totalorder %v162, %v157
    %vm167 = vcmp.eq.s32.totalorder %v165, %v157
    %v168 = vsel %vm166, 1, 0
    %v169 = vsel %vm167, 1, 0
    %v170 = vcvt.s32.f32 %v168
    %v171 = vcvt.s32.f32 %v169
    %v172 = vld [vmem:[%s3] sm:$0xff]
    %vm173 = vcmask 64512
    %v175 = vsel %vm173, %v170, 0
    %v178 = vsel %vm173, %v171, 0
    %180 = vmatprep.subr.mxu0 0.0
    %181 = vmatpush1.msra.mxu0 %v172
    %182 = vmatprep.subr.mxu0 0.0
    %183 = vmatpush1.msra.mxu0 0.0
    %184 = vmatprep.subr.mxu0 0.0
    %185 = vmatpush1.msra.mxu0 0.0
    %186 = vmatprep.subr.mxu0 0.0
    %187 = vmatpush1.msra.mxu0 0.0
    %188 = vmatprep.subr.mxu0 0.0
    %189 = vmatpush1.msra.mxu0 0.0
    %190 = vmatprep.subr.mxu0 0.0
    %191 = vmatpush1.msra.mxu0 0.0
    %192 = vmatprep.subr.mxu0 0.0
    %193 = vmatpush1.msra.mxu0 0.0
    %194 = vmatprep.subr.mxu0 0.0
    %195 = vmatpush1.msra.mxu0 0.0
    %196 = vmatprep.subr.mxu0 0.0
    %197 = vmatpush1.msra.mxu0 0.0
    %198 = vmatprep.subr.mxu0 0.0
    %199 = vmatpush1.msra.mxu0 0.0
    %200 = vmatprep.subr.mxu0 0.0
    %201 = vmatpush1.msra.mxu0 0.0
    %202 = vmatprep.subr.mxu0 0.0
    %203 = vmatpush1.msra.mxu0 0.0
    %204 = vmatprep.subr.mxu0 0.0
    %205 = vmatpush1.msra.mxu0 0.0
    %206 = vmatprep.subr.mxu0 0.0
    %207 = vmatpush1.msra.mxu0 0.0
    %208 = vmatprep.subr.mxu0 0.0
    %209 = vmatpush1.msra.mxu0 0.0
    %210 = vmatprep.subr.mxu0 0.0
    %211 = vmatpush1.msra.mxu0 0.0
    %212 = vmatprep.subr.mxu0 0.0
    %213 = vmatpush1.msra.mxu0 0.0
    %214 = vmatprep.subr.mxu0 0.0
    %215 = vmatpush1.msra.mxu0 0.0
    %216 = vmatprep.subr.mxu0 0.0
    %217 = vmatpush1.msra.mxu0 0.0
    %218 = vmatprep.subr.mxu0 0.0
    %219 = vmatpush1.msra.mxu0 0.0
    %220 = vmatprep.subr.mxu0 0.0
    %221 = vmatpush1.msra.mxu0 0.0
    %222 = vmatprep.subr.mxu0 0.0
    %223 = vmatpush1.msra.mxu0 0.0
    %224 = vmatprep.subr.mxu0 0.0
    %225 = vmatpush1.msra.mxu0 0.0
    %226 = vmatprep.subr.mxu0 0.0
    %227 = vmatpush1.msra.mxu0 0.0
    %228 = vmatprep.subr.mxu0 0.0
    %229 = vmatpush1.msra.mxu0 0.0
    %230 = vmatprep.subr.mxu0 0.0
    %231 = vmatpush1.msra.mxu0 0.0
    %232 = vmatprep.subr.mxu0 0.0
    %233 = vmatpush1.msra.mxu0 0.0
    %234 = vmatprep.subr.mxu0 0.0
    %235 = vmatpush1.msra.mxu0 0.0
    %236 = vmatprep.subr.mxu0 0.0
    %237 = vmatpush1.msra.mxu0 0.0
    %238 = vmatprep.subr.mxu0 0.0
    %239 = vmatpush1.msra.mxu0 0.0
    %240 = vmatprep.subr.mxu0 0.0
    %241 = vmatpush1.msra.mxu0 0.0
    %242 = vmatprep.subr.mxu0 0.0
    %243 = vmatpush1.msra.mxu0 0.0
    %244 = vmatprep.mubr.f32.mxu0 0.0
    %245 = vmatmul.mubr.f32.gmra.mrb[0].mxu0 %v175
    %v246 = vpop.f32.mrb[0].mxu0
    %v247 = vadd.f32 0.0, %v246
    %v248 = vpop.f32.mrb[0].mxu0
    %249 = vmatprep.mubr.f32.mxu0 0.0
    %250 = vmatmul.mubr.f32.gmra.mrb[0].mxu0 %v178
    %v251 = vpop.f32.mrb[0].mxu0
    %v252 = vadd.f32 0.0, %v251
    %v253 = vpop.f32.mrb[0].mxu0
    %254 = vdwg.mxu0
    %v255 = vmul.f32 %v247, %v150
    %v256 = vmul.f32 %v252, %v153
    %257 = vst [vmem:[#allocation5] sm:$0xff] %v255
    %258 = vst [vmem:[#allocation5 + $0x8] sm:$0xff] %v256
    // Predicated region
    $region26: #{tpu_custom_call.1} parent=1 // pred_check
      _
    $region27: #{tpu_custom_call.1} parent=1 // pred_check_branch
      %260 = sbr.rel (0) target = $region29
    $region28: #{tpu_custom_call.1} parent=1 // pred_region
      %s262 = ssub.s32 256, 256
      %263 = vsyncadd [#allocation4], %s262
      %s264 = sshll.u32 [#allocation5], 4
      %s265 = int_to_ptr.vmem [resolvable:$true] %s264
      %270 = dma.vmem_to_hbm [thread:$0]  %s265, 256, %s5, [#allocation4], 128, 128, 8
    $region29: #{tpu_custom_call.1} parent=1 // pred_fallthru
      _
    // Predicated region
    $region30: #{tpu_custom_call.1} parent=1 // pred_check
      _
    $region31: #{tpu_custom_call.1} parent=1 // pred_check_branch
      %272 = sbr.rel (0) target = $region33
    $region32: #{tpu_custom_call.1} parent=1 // pred_region
      %273 = dma.done [#allocation4], 256
    $region33: #{tpu_custom_call.1} parent=1 // pred_fallthru
      _
    %274 = vsyncpa [#allocation3], 1
    %275 = vsyncpa [#allocation4], 1

</llo_original>
